<compile_context>
chip_gen: v6e
topology: v6e:2x2x1
jax: 0.10.0
libtpu: 0.0.40
codegen_flags: <defaults>
</compile_context>

<pallas_src>
import functools
import math

import jax
import jax.numpy as jnp
from jax.experimental import pallas as pl
from jax.experimental.pallas import tpu as pltpu

_LANE = 128
_FUSED_WEIGHT_BYTES = 16 * 1024 * 1024  # keep resident weights under this in fused kernels


@functools.lru_cache(maxsize=None)
def _vmem_limit():
    """~half of physical VMEM: 64 MiB on v5e/v6e (128 MiB phys), 32 MiB on v7x (64 MiB phys)."""
    try:
        cap = int(pltpu.get_tpu_info().vmem_capacity_bytes)
        return int(max(32 * 1024 * 1024, min(cap // 2, 96 * 1024 * 1024)))
    except Exception:
        return 32 * 1024 * 1024


# ---------------------------------------------------------------------------
# tiling helpers
# ---------------------------------------------------------------------------
def _sublane(dtype):
    # f32 sublane packing = 8 rows, bf16 = 16 rows
    return 8 if jnp.dtype(dtype).itemsize >= 4 else 16


def _round_up(x, m):
    return ((x + m - 1) // m) * m


def _cdiv(a, b):
    return -(-a // b)


def _balanced_row_tile(rows, target, align):
    """Split `rows` into equal tiles near `target`, aligned to `align`.

    Returns (tile, padded_rows).  Pads a few rows instead of shrinking tiles.
    """
    num_tiles = max(1, _cdiv(rows, max(target, align)))
    tile = _round_up(_cdiv(rows, num_tiles), align)
    return tile, tile * num_tiles


def _choose_divisor_tile(dim, target, align):
    """Largest multiple of `align` <= target that divides `dim`; else full dim."""
    if dim <= target:
        return dim
    t = (target // align) * align
    while t >= align:
        if dim % t == 0:
            return t
        t -= align
    return dim


def _pad2d(x, rows_p, cols_p):
    r, c = x.shape
    if rows_p == r and cols_p == c:
        return x
    return jnp.pad(x, ((0, rows_p - r), (0, cols_p - c)))


# ---------------------------------------------------------------------------
# Generic linear (matmul + bias [+ ReLU]) kernel — used for the fused QKV projection
# and as the fallback path when resident-weight fusion does not fit.
# ---------------------------------------------------------------------------
def _linear_kernel(x_ref, w_ref, b_ref, o_ref, acc_ref, *, activation):
    @pl.when(pl.program_id(2) == 0)
    def _():
        acc_ref[...] = jnp.zeros_like(acc_ref)

    # native-dtype operands on the MXU; f32 accumulation only
    acc_ref[...] += jnp.dot(x_ref[...], w_ref[...], preferred_element_type=jnp.float32)

    @pl.when(pl.program_id(2) == pl.num_programs(2) - 1)
    def _():
        y = acc_ref[...] + b_ref[...]
        if activation == "relu":
            y = jnp.maximum(y, 0.0)
        o_ref[...] = y.astype(o_ref.dtype)


def linear(x, w, b, *, activation=None, tile_m=256, tile_n=512, tile_k=512):
    """y = x @ w + b, with `w` stored (in_features, out_features).

    K and N are zero-padded to 128-lane multiples (lane-dense stores; no single giant
    non-divisible weight tile).  Tile targets are 256-class for the 2x256^2 MXUs.
    """
    M, K = x.shape
    K2, N = w.shape
    assert K == K2 and b.shape == (N,)

    Kp = _round_up(K, _LANE)
    Np = _round_up(N, _LANE)
    sub = _sublane(x.dtype)
    tm, Mp = _balanced_row_tile(M, tile_m, sub)
    tn = _choose_divisor_tile(Np, tile_n, _LANE)
    tk = _choose_divisor_tile(Kp, tile_k, _LANE)

    xp = _pad2d(x, Mp, Kp)
    wp = _pad2d(w, Kp, Np)
    bp = _pad2d(b.reshape(1, N).astype(jnp.float32), 1, Np)

    out = pl.pallas_call(
        functools.partial(_linear_kernel, activation=activation),
        out_shape=jax.ShapeDtypeStruct((Mp, Np), x.dtype),
        grid_spec=pltpu.PrefetchScalarGridSpec(
            num_scalar_prefetch=0,
            grid=(Mp // tm, Np // tn, Kp // tk),
            in_specs=[
                pl.BlockSpec((tm, tk), lambda i, j, k: (i, k)),
                pl.BlockSpec((tk, tn), lambda i, j, k: (k, j)),
                pl.BlockSpec((1, tn), lambda i, j, k: (0, j)),
            ],
            out_specs=pl.BlockSpec((tm, tn), lambda i, j, k: (i, j)),
            scratch_shapes=[pltpu.VMEM((tm, tn), jnp.float32)],
        ),
        compiler_params=pltpu.CompilerParams(
            dimension_semantics=("parallel", "parallel", "arbitrary"),
            vmem_limit_bytes=_vmem_limit(),
        ),
    )(xp, wp, bp)
    if Mp != M or Np != N:
        out = out[:M, :N]
    return out


# ---------------------------------------------------------------------------
# Multi-head attention: heads indexed via BlockSpec (no HBM transposes),
# several heads packed per grid step so the block last dim is 128-lane dense.
# ---------------------------------------------------------------------------
def _mha_kernel(q_ref, k_ref, v_ref, o_ref, *, scale, hb, dk):
    q_all = q_ref[0]          # (L, hb*dk)
    k_all = k_ref[0]
    v_all = v_ref[0]
    outs = []
    for h in range(hb):       # static unroll over packed heads
        lo, hi = h * dk, (h + 1) * dk
        q = q_all[:, lo:hi] * scale                     # scale folded into Q (L*dk muls)
        k = k_all[:, lo:hi]
        v = v_all[:, lo:hi]
        s = jax.lax.dot_general(q, k, (((1,), (1,)), ((), ())),
                                preferred_element_type=jnp.float32)   # (L, L)
        m = jnp.max(s, axis=-1, keepdims=True)
        p = jnp.exp(s - m)
        inv = pl.reciprocal(jnp.sum(p, axis=-1, keepdims=True), approx=True)  # EUP
        o = jnp.dot(p.astype(v.dtype), v, preferred_element_type=jnp.float32) * inv
        outs.append(o)
    o_block = outs[0] if hb == 1 else jnp.concatenate(outs, axis=-1)
    o_ref[0] = o_block.astype(o_ref.dtype)              # one lane-dense store


def multi_head_attention(qkv, *, num_heads, d_k, scale):
    """qkv: (B, L, 3*H*dk) packed [Q | K | V] in merged-head layout -> (B, L, H*dk)."""
    B, L, three_hdk = qkv.shape
    H, dk = num_heads, d_k
    Hdk = H * dk
    assert three_hdk == 3 * Hdk

    # smallest head-group whose width is a 128-lane multiple
    hb = next((g for g in range(1, H + 1)
               if H % g == 0 and (g * dk) % _LANE == 0), None)
    if hb is not None:
        groups = H // hb
        blk = (1, L, hb * dk)

        def _spec(off):
            return pl.BlockSpec(blk, lambda b, g, _o=off: (b, 0, g + _o))

        in_specs = [_spec(0), _spec(groups), _spec(2 * groups)]
        operands = (qkv, qkv, qkv)      # same array, three different windows (Q / K / V)
    else:
        # TODO(synk): head width not 128-lane alignable; fall back to whole-Q/K/V blocks
        # on sliced copies (costs extra HBM slice passes).
        hb, groups = H, 1
        blk = (1, L, Hdk)
        spec = pl.BlockSpec(blk, lambda b, g: (b, 0, 0))
        in_specs = [spec, spec, spec]
        operands = (qkv[:, :, :Hdk], qkv[:, :, Hdk:2 * Hdk], qkv[:, :, 2 * Hdk:])

    # TODO(synk): switch to a flash-style KV-tiled online-softmax kernel once L is large
    # enough that the f32 (L, L) score tile no longer fits in VMEM (mandatory on v7x).
    return pl.pallas_call(
        functools.partial(_mha_kernel, scale=scale, hb=hb, dk=dk),
        out_shape=jax.ShapeDtypeStruct((B, L, Hdk), qkv.dtype),
        grid_spec=pltpu.PrefetchScalarGridSpec(
            num_scalar_prefetch=0,
            grid=(B, groups),
            in_specs=in_specs,
            out_specs=pl.BlockSpec(blk, lambda b, g: (b, 0, g)),
        ),
        compiler_params=pltpu.CompilerParams(
            dimension_semantics=("parallel", "parallel"),
            vmem_limit_bytes=_vmem_limit(),
        ),
    )(*operands)


# ---------------------------------------------------------------------------
# Fused: (a @ Wo + bo) + residual, then LayerNorm — one kernel, weight resident
# ---------------------------------------------------------------------------
def _matmul_add_ln_kernel(a_ref, r_ref, w_ref, b_ref, g_ref, beta_ref, o_ref,
                          *, eps, reduce_size):
    y = jnp.dot(a_ref[...], w_ref[...], preferred_element_type=jnp.float32)
    y = y + b_ref[...] + r_ref[...].astype(jnp.float32)
    mean = jnp.mean(y, axis=-1, keepdims=True)
    diff = y - mean
    # torch.var default: UNBIASED (divide by N-1); eps OUTSIDE the sqrt
    var = jnp.sum(diff * diff, axis=-1, keepdims=True) * (1.0 / (reduce_size - 1))
    inv = pl.reciprocal(jnp.sqrt(var) + eps, approx=True)
    o_ref[...] = (diff * inv * g_ref[...] + beta_ref[...]).astype(o_ref.dtype)


def matmul_add_layernorm(a, resid, w, b, gamma, beta, *, eps=1e-5, tile_rows=256):
    """LayerNorm(resid + (a @ w + b)) with the residual add + LN fused into the epilogue."""
    M, K = a.shape
    K2, D = w.shape
    assert K == K2 and resid.shape == (M, D)

    if w.size * jnp.dtype(w.dtype).itemsize > _FUSED_WEIGHT_BYTES:
        # TODO(synk): K-tile the resident weight instead of this 2-pass fallback.
        return add_layer_norm(resid, linear(a, w, b), gamma, beta, eps=eps)

    sub = _sublane(a.dtype)
    tm, Mp = _balanced_row_tile(M, tile_rows, sub)
    ap = _pad2d(a, Mp, K)
    rp = _pad2d(resid, Mp, D)
    bp = b.reshape(1, D).astype(jnp.float32)
    gp = gamma.reshape(1, D).astype(jnp.float32)
    btp = beta.reshape(1, D).astype(jnp.float32)

    out = pl.pallas_call(
        functools.partial(_matmul_add_ln_kernel, eps=eps, reduce_size=D),
        out_shape=jax.ShapeDtypeStruct((Mp, D), a.dtype),
        grid_spec=pltpu.PrefetchScalarGridSpec(
            num_scalar_prefetch=0,
            grid=(Mp // tm,),
            in_specs=[
                pl.BlockSpec((tm, K), lambda i: (i, 0)),
                pl.BlockSpec((tm, D), lambda i: (i, 0)),
                pl.BlockSpec((K, D), lambda i: (0, 0)),   # weight stays resident
                pl.BlockSpec((1, D), lambda i: (0, 0)),
                pl.BlockSpec((1, D), lambda i: (0, 0)),
                pl.BlockSpec((1, D), lambda i: (0, 0)),
            ],
            out_specs=pl.BlockSpec((tm, D), lambda i: (i, 0)),
        ),
        compiler_params=pltpu.CompilerParams(
            dimension_semantics=("parallel",),
            vmem_limit_bytes=_vmem_limit(),
        ),
    )(ap, rp, w, bp, gp, btp)
    return out[:M] if Mp != M else out


# ---------------------------------------------------------------------------
# Fused FFN: relu(x @ W1 + b1) @ W2 + b2 + x, then LayerNorm — one kernel,
# the (rows, dim_ff) intermediate never leaves VMEM.
# ---------------------------------------------------------------------------
def _ffn_add_ln_kernel(x_ref, w1_ref, b1_ref, w2_ref, b2_ref, g_ref, beta_ref, o_ref,
                       *, eps, reduce_size):
    x = x_ref[...]
    h = jnp.dot(x, w1_ref[...], preferred_element_type=jnp.float32) + b1_ref[...]
    h = jnp.maximum(h, 0.0)                                           # ReLU
    y = jnp.dot(h.astype(x.dtype), w2_ref[...], preferred_element_type=jnp.float32)
    y = y + b2_ref[...] + x.astype(jnp.float32)                       # residual
    mean = jnp.mean(y, axis=-1, keepdims=True)
    diff = y - mean
    var = jnp.sum(diff * diff, axis=-1, keepdims=True) * (1.0 / (reduce_size - 1))
    inv = pl.reciprocal(jnp.sqrt(var) + eps, approx=True)
    o_ref[...] = (diff * inv * g_ref[...] + beta_ref[...]).astype(o_ref.dtype)


def ffn_add_layernorm(x, w1, b1, w2, b2, gamma, beta, *, eps=1e-5, tile_rows=256):
    M, D = x.shape
    D2, F = w1.shape
    assert D == D2 and w2.shape == (F, D)

    wbytes = (w1.size * jnp.dtype(w1.dtype).itemsize
              + w2.size * jnp.dtype(w2.dtype).itemsize)
    if wbytes > _FUSED_WEIGHT_BYTES:
        # TODO(synk): K-tile W1/W2 (or use bf16 weights) instead of the 2-pass fallback.
        ff = linear(x, w1, b1, activation="relu")
        ff = linear(ff, w2, b2)
        return add_layer_norm(x, ff, gamma, beta, eps=eps)

    sub = _sublane(x.dtype)
    tm, Mp = _balanced_row_tile(M, tile_rows, sub)
    xp = _pad2d(x, Mp, D)
    b1p = b1.reshape(1, F).astype(jnp.float32)
    b2p = b2.reshape(1, D).astype(jnp.float32)
    gp = gamma.reshape(1, D).astype(jnp.float32)
    btp = beta.reshape(1, D).astype(jnp.float32)

    out = pl.pallas_call(
        functools.partial(_ffn_add_ln_kernel, eps=eps, reduce_size=D),
        out_shape=jax.ShapeDtypeStruct((Mp, D), x.dtype),
        grid_spec=pltpu.PrefetchScalarGridSpec(
            num_scalar_prefetch=0,
            grid=(Mp // tm,),
            in_specs=[
                pl.BlockSpec((tm, D), lambda i: (i, 0)),
                pl.BlockSpec((D, F), lambda i: (0, 0)),   # W1 resident
                pl.BlockSpec((1, F), lambda i: (0, 0)),
                pl.BlockSpec((F, D), lambda i: (0, 0)),   # W2 resident
                pl.BlockSpec((1, D), lambda i: (0, 0)),
                pl.BlockSpec((1, D), lambda i: (0, 0)),
                pl.BlockSpec((1, D), lambda i: (0, 0)),
            ],
            out_specs=pl.BlockSpec((tm, D), lambda i: (i, 0)),
        ),
        compiler_params=pltpu.CompilerParams(
            dimension_semantics=("parallel",),
            vmem_limit_bytes=_vmem_limit(),
        ),
    )(xp, w1, b1p, w2, b2p, gp, btp)
    return out[:M] if Mp != M else out


# ---------------------------------------------------------------------------
# Standalone residual-add + LayerNorm (fallback path only)
# ---------------------------------------------------------------------------
def _add_layernorm_kernel(x_ref, r_ref, g_ref, b_ref, o_ref, *, eps, reduce_size):
    s = x_ref[...].astype(jnp.float32) + r_ref[...].astype(jnp.float32)
    mean = jnp.mean(s, axis=-1, keepdims=True)
    diff = s - mean
    var = jnp.sum(diff * diff, axis=-1, keepdims=True) * (1.0 / (reduce_size - 1))
    inv = pl.reciprocal(jnp.sqrt(var) + eps, approx=True)
    o_ref[...] = (diff * inv * g_ref[...] + b_ref[...]).astype(o_ref.dtype)


def add_layer_norm(x, resid, gamma, beta, *, eps=1e-5, tile_rows=512):
    rows, D = x.shape
    sub = _sublane(x.dtype)
    tr, rows_p = _balanced_row_tile(rows, tile_rows, sub)
    xp = _pad2d(x, rows_p, D)
    rp = _pad2d(resid, rows_p, D)
    g2 = gamma.reshape(1, D).astype(jnp.float32)
    b2 = beta.reshape(1, D).astype(jnp.float32)
    out = pl.pallas_call(
        functools.partial(_add_layernorm_kernel, eps=eps, reduce_size=D),
        out_shape=jax.ShapeDtypeStruct((rows_p, D), x.dtype),
        grid_spec=pltpu.PrefetchScalarGridSpec(
            num_scalar_prefetch=0,
            grid=(rows_p // tr,),
            in_specs=[
                pl.BlockSpec((tr, D), lambda i: (i, 0)),
                pl.BlockSpec((tr, D), lambda i: (i, 0)),
                pl.BlockSpec((1, D), lambda i: (0, 0)),
                pl.BlockSpec((1, D), lambda i: (0, 0)),
            ],
            out_specs=pl.BlockSpec((tr, D), lambda i: (i, 0)),
        ),
        compiler_params=pltpu.CompilerParams(
            dimension_semantics=("parallel",),
            vmem_limit_bytes=_vmem_limit(),
        ),
    )(xp, rp, g2, b2)
    return out[:rows] if rows_p != rows else out


# ---------------------------------------------------------------------------
# EncoderBlock: parameters + forward
# ---------------------------------------------------------------------------
def init_encoder_block_params(key, dim_model, dim_ff, num_heads):
    d_k = dim_model  # per the module: MultiHeadAttention(..., d_k=dim_model)
    keys = jax.random.split(key, 6)

    def lin_init(k, fan_in, fan_out):
        # torch nn.Linear default init: U(-1/sqrt(fan_in), 1/sqrt(fan_in))
        kw, kb = jax.random.split(k)
        bound = 1.0 / math.sqrt(fan_in)
        W = jax.random.uniform(kw, (fan_in, fan_out), jnp.float32, -bound, bound)
        b = jax.random.uniform(kb, (fan_out,), jnp.float32, -bound, bound)
        return W, b  # stored (in, out), i.e. already transposed vs torch

    Wq, bq = lin_init(keys[0], dim_model, d_k * num_heads)
    Wk, bk = lin_init(keys[1], dim_model, d_k * num_heads)
    Wv, bv = lin_init(keys[2], dim_model, d_k * num_heads)
    Wo, bo = lin_init(keys[3], d_k * num_heads, dim_model)
    W1, b1 = lin_init(keys[4], dim_model, dim_ff)
    W2, b2 = lin_init(keys[5], dim_ff, dim_model)

    return dict(
        num_heads=num_heads, d_k=d_k,
        Wq=Wq, bq=bq, Wk=Wk, bk=bk, Wv=Wv, bv=bv, Wo=Wo, bo=bo,
        # fused QKV weights so x is streamed from HBM once for all three projections
        Wqkv=jnp.concatenate([Wq, Wk, Wv], axis=1),
        bqkv=jnp.concatenate([bq, bk, bv], axis=0),
        W1=W1, b1=b1, W2=W2, b2=b2,
        gamma1=jnp.ones((dim_model,), jnp.float32),
        beta1=jnp.zeros((dim_model,), jnp.float32),
        gamma2=jnp.ones((dim_model,), jnp.float32),
        beta2=jnp.zeros((dim_model,), jnp.float32),
    )


def encoder_block_forward(x, p, *, eps=1e-5):
    B, L, dm = x.shape
    H, dk = p["num_heads"], p["d_k"]
    rows = B * L
    x2 = x.reshape(rows, dm)

    # fused Q|K|V projection: one matmul, lane-dense 3*H*dk output
    qkv = linear(x2, p["Wqkv"], p["bqkv"]).reshape(B, L, 3 * H * dk)

    # multi-head self-attention; heads selected via BlockSpec (no HBM transposes)
    scale = 1.0 / math.sqrt(dk * H)  # module: 1/sqrt(d_k * num_heads)
    attn = multi_head_attention(qkv, num_heads=H, d_k=dk, scale=scale)  # (B, L, H*dk)

    # TODO(synk): nn.Dropout is identity here (deterministic eval-mode forward).
    # Wo projection + residual add + LayerNorm fused into one kernel
    h1 = matmul_add_layernorm(attn.reshape(rows, H * dk), x2,
                              p["Wo"], p["bo"], p["gamma1"], p["beta1"], eps=eps)

    # FFN (Linear -> ReLU -> Linear) + residual add + LayerNorm fused into one kernel
    out = ffn_add_layernorm(h1, p["W1"], p["b1"], p["W2"], p["b2"],
                            p["gamma2"], p["beta2"], eps=eps)
    return out.reshape(B, L, dm)


# ---------------------------------------------------------------------------
# Pure-JAX reference (mirrors the PyTorch forward)
# ---------------------------------------------------------------------------
def encoder_block_ref(x, p, *, eps=1e-5):
    B, L, dm = x.shape
    H, dk = p["num_heads"], p["d_k"]
    hp = jax.lax.Precision.HIGHEST
    x2 = x.reshape(B * L, dm).astype(jnp.float32)

    def lin(t, W, b):
        return jnp.dot(t, W, precision=hp) + b

    def split_heads(t):
        return t.reshape(B, L, H, dk).transpose(0, 2, 1, 3)

    q = split_heads(lin(x2, p["Wq"], p["bq"]))
    k = split_heads(lin(x2, p["Wk"], p["bk"]))
    v = split_heads(lin(x2, p["Wv"], p["bv"]))
    s = jnp.einsum("bhid,bhjd->bhij", q, k, precision=hp) / math.sqrt(dk * H)
    a = jax.nn.softmax(s, axis=-1)
    o = jnp.einsum("bhij,bhjd->bhid", a, v, precision=hp)
    o = o.transpose(0, 2, 1, 3).reshape(B * L, H * dk)
    attn_out = lin(o, p["Wo"], p["bo"])

    def ln(t, g, bta):
        mean = jnp.mean(t, axis=-1, keepdims=True)
        var = jnp.var(t, axis=-1, keepdims=True, ddof=1)  # unbiased, like torch
        return g * (t - mean) / (jnp.sqrt(var) + eps) + bta

    h1 = ln(x2 + attn_out, p["gamma1"], p["beta1"])
    ff = lin(jnp.maximum(lin(h1, p["W1"], p["b1"]), 0.0), p["W2"], p["b2"])
    out = ln(h1 + ff, p["gamma2"], p["beta2"])
    return out.reshape(B, L, dm).astype(x.dtype)


if __name__ == "__main__":
    # Small, module-consistent shapes: batch=2, seq=8, dim_model=32, dim_ff=64, 8 heads.
    dim_model, dim_ff, num_heads = 32, 64, 8
    batch, seq = 2, 8

    key = jax.random.PRNGKey(0)
    kx, kp = jax.random.split(key)
    x = jax.random.normal(kx, (batch, seq, dim_model), dtype=jnp.float32)
    params = init_encoder_block_params(kp, dim_model, dim_ff, num_heads)

    out = encoder_block_forward(x, params)
    out = jax.block_until_ready(out)

    ref = encoder_block_ref(x, params)
    assert out.shape == x.shape
    assert bool(jnp.all(jnp.isfinite(out))), "non-finite output"
    max_diff = float(jnp.max(jnp.abs(out - ref)))
    assert jnp.allclose(out, ref, atol=2e-2, rtol=2e-2), f"mismatch vs reference: {max_diff}"

    print("KERNEL_OK")
</pallas_src>

<mosaic_0001>
module attributes {stable_mosaic.version = 11 : i64} {
  func.func @_linear_kernel(%arg0: i32, %arg1: i32, %arg2: i32, %arg3: memref<16x128xf32, #tpu.memory_space<vmem>>, %arg4: memref<128x384xf32, #tpu.memory_space<vmem>>, %arg5: memref<1x384xf32, #tpu.memory_space<vmem>>, %arg6: memref<16x384xf32, #tpu.memory_space<vmem>>, %arg7: memref<16x384xf32, #tpu.memory_space<vmem>>) attributes {dimension_semantics = [#tpu.dimension_semantics<parallel>, #tpu.dimension_semantics<parallel>, #tpu.dimension_semantics<arbitrary>], iteration_bounds = array<i64: 1, 2, 1>, scalar_prefetch = 0 : i64, scratch_operands = 1 : i64, tpu.core_type = #tpu.core_type<tc>, window_params = [{transform_indices = @transform_0, window_bounds = array<i64: 16, 128>}, {transform_indices = @transform_1, window_bounds = array<i64: 128, 384>}, {transform_indices = @transform_2, window_bounds = array<i64: 1, 384>}, {transform_indices = @transform_3, window_bounds = array<i64: 16, 384>}]} {
    %c0_i32 = arith.constant 0 : i32
    %0 = arith.cmpi eq, %arg2, %c0_i32 : i32
    %1 = arith.extui %0 : i1 to i32
    %c0_i32_0 = arith.constant 0 : i32
    %2 = arith.cmpi ne, %1, %c0_i32_0 : i32
    scf.if %2 {
      %cst_10 = arith.constant 0.000000e+00 : f32
      %12 = vector.broadcast %cst_10 : f32 to vector<16x384xf32>
      %c0_11 = arith.constant 0 : index
      %c0_12 = arith.constant 0 : index
      %13 = vector.load %arg7[%c0_11, %c0_12] : memref<16x384xf32, #tpu.memory_space<vmem>>, vector<16x384xf32>
      tpu.vector_store %arg7[%c0_11, %c0_12], %12 {strides = array<i32>} : memref<16x384xf32, #tpu.memory_space<vmem>>, vector<16x384xf32>,
    } else {
    }
    %c0 = arith.constant 0 : index
    %c0_1 = arith.constant 0 : index
    %3 = vector.load %arg7[%c0, %c0_1] : memref<16x384xf32, #tpu.memory_space<vmem>>, vector<16x384xf32>
    %c0_2 = arith.constant 0 : index
    %c0_3 = arith.constant 0 : index
    %4 = vector.load %arg3[%c0_2, %c0_3] : memref<16x128xf32, #tpu.memory_space<vmem>>, vector<16x128xf32>
    %c0_4 = arith.constant 0 : index
    %c0_5 = arith.constant 0 : index
    %5 = vector.load %arg4[%c0_4, %c0_5] : memref<128x384xf32, #tpu.memory_space<vmem>>, vector<128x384xf32>
    %cst = arith.constant dense<0.000000e+00> : vector<16x384xf32>
    %6 = tpu.matmul %4, %5, %cst {dimension_numbers = #tpu.dot_dimension_numbers<[1], [0], [0], [1], [0, 0, 1, 1], [], []>} : vector<16x128xf32>, vector<128x384xf32>, vector<16x384xf32> -> vector<16x384xf32>
    %7 = arith.addf %3, %6 : vector<16x384xf32>
    %c0_6 = arith.constant 0 : index
    %c0_7 = arith.constant 0 : index
    %8 = vector.load %arg7[%c0_6, %c0_7] : memref<16x384xf32, #tpu.memory_space<vmem>>, vector<16x384xf32>
    tpu.vector_store %arg7[%c0_6, %c0_7], %7 {strides = array<i32>} : memref<16x384xf32, #tpu.memory_space<vmem>>, vector<16x384xf32>,
    %c0_i32_8 = arith.constant 0 : i32
    %9 = arith.cmpi eq, %arg2, %c0_i32_8 : i32
    %10 = arith.extui %9 : i1 to i32
    %c0_i32_9 = arith.constant 0 : i32
    %11 = arith.cmpi ne, %10, %c0_i32_9 : i32
    scf.if %11 {
      %c0_10 = arith.constant 0 : index
      %c0_11 = arith.constant 0 : index
      %12 = vector.load %arg7[%c0_10, %c0_11] : memref<16x384xf32, #tpu.memory_space<vmem>>, vector<16x384xf32>
      %c0_12 = arith.constant 0 : index
      %c0_13 = arith.constant 0 : index
      %13 = vector.load %arg5[%c0_12, %c0_13] : memref<1x384xf32, #tpu.memory_space<vmem>>, vector<1x384xf32>
      %14 = vector.broadcast %13 : vector<1x384xf32> to vector<16x384xf32>
      %15 = arith.addf %12, %14 : vector<16x384xf32>
      %c0_14 = arith.constant 0 : index
      %c0_15 = arith.constant 0 : index
      %16 = vector.load %arg6[%c0_14, %c0_15] : memref<16x384xf32, #tpu.memory_space<vmem>>, vector<16x384xf32>
      tpu.vector_store %arg6[%c0_14, %c0_15], %15 {strides = array<i32>} : memref<16x384xf32, #tpu.memory_space<vmem>>, vector<16x384xf32>,
    } else {
    }
    return
  }
  func.func @transform_0(%arg0: i32, %arg1: i32, %arg2: i32) -> (i32, i32) {
    %c0_i32 = arith.constant 0 : i32
    return %arg0, %arg2 : i32, i32
  }
  func.func @transform_1(%arg0: i32, %arg1: i32, %arg2: i32) -> (i32, i32) {
    %c0_i32 = arith.constant 0 : i32
    return %arg2, %arg1 : i32, i32
  }
  func.func @transform_2(%arg0: i32, %arg1: i32, %arg2: i32) -> (i32, i32) {
    %c0_i32 = arith.constant 0 : i32
    %c0_i32_0 = arith.constant 0 : i32
    return %c0_i32, %arg1 : i32, i32
  }
  func.func @transform_3(%arg0: i32, %arg1: i32, %arg2: i32) -> (i32, i32) {
    %c0_i32 = arith.constant 0 : i32
    return %arg0, %arg1 : i32, i32
  }
}

</mosaic_0001>

<llo_original>
// kernel: tpu_custom_call.1
$region0: #{tpu_custom_call.1}
  #allocation0 [shape = 'u32[]', space=smem, size = 0x4, offset = 0x4, fixed_abs, tag = 'smem constant byte address 0x4 - core index']
  #allocation1 [shape = 'u32[144,128]{1,0:T(1,128)}', space=vmem, size = 0x12000, scoped, tag = 'internal scratch']
  #allocation2 [shape = 'f32[16,384]{1,0:T(8,128)}', space=vmem, size = 0x6000, scoped, tag = 'scratch operand']
  %s0 = inlined_call_operand.hbm [shape: f32[16,128], index: 0, kind: input, shape index: {}]
  %s1 = inlined_call_operand.hbm [shape: f32[128,768], index: 1, kind: input, shape index: {}]
  %s2 = inlined_call_operand.hbm [shape: f32[1,768], index: 2, kind: input, shape index: {}]
  %s3 = inlined_call_operand.hbm [shape: f32[16,768], index: 3, kind: output, shape index: {}]
  %s4 = sld [smem:[#allocation0]]
  $region65: #{tpu_custom_call.1} parent=0
    _
  %s6 = ssub.s32 1, %s4
  %s7 = scalar_select 0, %s6, %s4
  $region1: #{tpu_custom_call.1} parent=0
    #allocation3 [shape = 'u8[8192]{0}', space=vmem, size = 0x2000, scoped, tag = 'input window, operand 0, single buffered']
    #allocation4 [shape = 's32[2]{0}', space=sflag, size = 0x8, scoped, tag = 'scoped memory for tpu_custom_call.1']
    #allocation5 [shape = 's32[2]{0}', space=sflag, size = 0x8, scoped, tag = 'scoped memory for tpu_custom_call.1']
    #allocation6 [shape = 'u8[393216]{0}', space=vmem, size = 0x60000, scoped, tag = 'input window, operand 1']
    #allocation7 [shape = 's32[2]{0}', space=sflag, size = 0x8, scoped, tag = 'scoped memory for tpu_custom_call.1']
    #allocation8 [shape = 'u8[3072]{0}', space=vmem, size = 0xc00, scoped, tag = 'input window, operand 2']
    #allocation9 [shape = 'u8[49152]{0}', space=vmem, size = 0xc000, scoped, tag = 'output window, operand 0']
    %8 = vsyncpa [#allocation4], 0
    %9 = vsyncpa [#allocation7], 0
    %s10 = scalar_lea.sflag [#allocation7], 1
    %11 = vsyncpa %s10, 0
    %12 = vsyncpa [#allocation5], 0
    %s13 = scalar_lea.sflag [#allocation5], 1
    %14 = vsyncpa %s13, 0
    loop: start=0, step=1, limit=4
    $region2: #{tpu_custom_call.1} parent=1 // loop_pre_header
      _
    $region3: #{tpu_custom_call.1} parent=1 // loop_header
      %s16 = sphi 0, %s20
      %p17 = scmp.ge.s32.totalorder %s16, 4
      %s23 = sphi 0, %s42
      %s24 = sphi 0, %s38
      %s25 = sphi 0, %s34
      %s26 = sphi 0, %s23
      %s27 = sphi 0, %s24
      %s28 = sphi 0, %s25
      %s29 = sphi 0, %s26
      %s30 = sphi 0, %s27
      %s31 = sphi 0, %s28
      %s47 = sphi 0, %s49
      %s50 = sphi 0, %s47
      %s51 = sphi 0, %s50
      %s67 = sphi 0, %s51
      %s75 = sphi 0, %s77
      %s78 = sphi 0, %s75
      %s79 = sphi 0, %s78
      %s95 = sphi 0, %s79
      %s101 = sphi 0, %s103
      %s104 = sphi 0, %s101
      %s105 = sphi 0, %s104
      %s121 = sphi 0, %s105
      %s129 = sphi 0, %s131
      %s132 = sphi 0, %s129
      %s133 = sphi 0, %s132
      %s149 = sphi 0, %s133
    $region4: #{tpu_custom_call.1} parent=1 // loop_header_branch
      %19 = sbr.rel (%p17) target = $region8
    $region5: #{tpu_custom_call.1} parent=1 // loop_body
      %s21 = ssub.s32 %s16, 1
      %s22 = ssub.s32 %s16, 2
      %s32 = sadd.s32 1, %s25
      %p33 = scmp.ge.s32.totalorder %s32, 1
      %s34 = scalar_select %p33, 0, %s32
      %s35 = sadd.s32 1, %s24
      %s36 = scalar_select %p33, %s35, %s24
      %p37 = scmp.ge.s32.totalorder %s36, 2
      %s38 = scalar_select %p37, 0, %s36
      %s39 = sadd.s32 1, %s23
      %s40 = scalar_select %p37, %s39, %s23
      %p41 = scmp.ge.s32.totalorder %s40, 1
      %s42 = scalar_select %p41, 0, %s40
      %s43 = ssub.s32 %s23, %s42
      %s44 = ssub.s32 %s25, %s34
      %s45 = sor.u32 %s43, %s44
      %p46 = scmp.eq.s32.totalorder %s45, 0
      %s48 = sadd.s32 %s47, 1
      %s49 = scalar_select %p46, %s47, %s48
      %p52 = pneg %p46
      %p53 = scmp.eq.s32.totalorder %s16, 1
      %p54 = por %p52, %p53
      %p55 = scmp.ne.s32.totalorder %s47, %s50
      %p56 = scmp.eq.s32.totalorder %s16, 0
      %p57 = por %p55, %p56
      %p58 = scmp.ne.s32.totalorder %s47, %s50
      %p59 = scmp.eq.s32.totalorder %s21, 1
      %p60 = por %p58, %p59
      %p61 = scmp.ne.s32.totalorder %s50, %s51
      %p62 = scmp.eq.s32.totalorder %s21, 0
      %p63 = por %p61, %p62
      %p64 = scmp.ne.s32.totalorder %s50, %s51
      %p65 = scmp.eq.s32.totalorder %s22, 1
      %p66 = por %p64, %p65
      %p68 = scmp.ne.s32.totalorder %s51, %s67
      %p69 = scmp.eq.s32.totalorder %s22, 0
      %p70 = por %p68, %p69
      %s71 = ssub.s32 %s25, %s34
      %s72 = ssub.s32 %s24, %s38
      %s73 = sor.u32 %s71, %s72
      %p74 = scmp.eq.s32.totalorder %s73, 0
      %s76 = sadd.s32 %s75, 1
      %s77 = scalar_select %p74, %s75, %s76
      %p80 = pneg %p74
      %p81 = scmp.eq.s32.totalorder %s16, 1
      %p82 = por %p80, %p81
      %p83 = scmp.ne.s32.totalorder %s75, %s78
      %p84 = scmp.eq.s32.totalorder %s16, 0
      %p85 = por %p83, %p84
      %p86 = scmp.ne.s32.totalorder %s75, %s78
      %p87 = scmp.eq.s32.totalorder %s21, 1
      %p88 = por %p86, %p87
      %p89 = scmp.ne.s32.totalorder %s78, %s79
      %p90 = scmp.eq.s32.totalorder %s21, 0
      %p91 = por %p89, %p90
      %p92 = scmp.ne.s32.totalorder %s78, %s79
      %p93 = scmp.eq.s32.totalorder %s22, 1
      %p94 = por %p92, %p93
      %p96 = scmp.ne.s32.totalorder %s79, %s95
      %p97 = scmp.eq.s32.totalorder %s22, 0
      %p98 = por %p96, %p97
      %s99 = ssub.s32 %s24, %s38
      %p100 = scmp.eq.s32.totalorder %s99, 0
      %s102 = sadd.s32 %s101, 1
      %s103 = scalar_select %p100, %s101, %s102
      %p106 = pneg %p100
      %p107 = scmp.eq.s32.totalorder %s16, 1
      %p108 = por %p106, %p107
      %p109 = scmp.ne.s32.totalorder %s101, %s104
      %p110 = scmp.eq.s32.totalorder %s16, 0
      %p111 = por %p109, %p110
      %p112 = scmp.ne.s32.totalorder %s101, %s104
      %p113 = scmp.eq.s32.totalorder %s21, 1
      %p114 = por %p112, %p113
      %p115 = scmp.ne.s32.totalorder %s104, %s105
      %p116 = scmp.eq.s32.totalorder %s21, 0
      %p117 = por %p115, %p116
      %p118 = scmp.ne.s32.totalorder %s104, %s105
      %p119 = scmp.eq.s32.totalorder %s22, 1
      %p120 = por %p118, %p119
      %p122 = scmp.ne.s32.totalorder %s105, %s121
      %p123 = scmp.eq.s32.totalorder %s22, 0
      %p124 = por %p122, %p123
      %s125 = ssub.s32 %s23, %s42
      %s126 = ssub.s32 %s24, %s38
      %s127 = sor.u32 %s125, %s126
      %p128 = scmp.eq.s32.totalorder %s127, 0
      %s130 = sadd.s32 %s129, 1
      %s131 = scalar_select %p128, %s129, %s130
      %p134 = pneg %p128
      %p135 = scmp.eq.s32.totalorder %s16, 1
      %p136 = por %p134, %p135
      %p137 = scmp.ne.s32.totalorder %s129, %s132
      %p138 = scmp.eq.s32.totalorder %s16, 0
      %p139 = por %p137, %p138
      %p140 = scmp.ne.s32.totalorder %s129, %s132
      %p141 = scmp.eq.s32.totalorder %s21, 1
      %p142 = por %p140, %p141
      %p143 = scmp.ne.s32.totalorder %s132, %s133
      %p144 = scmp.eq.s32.totalorder %s21, 0
      %p145 = por %p143, %p144
      %p146 = scmp.ne.s32.totalorder %s132, %s133
      %p147 = scmp.eq.s32.totalorder %s22, 1
      %p148 = por %p146, %p147
      %p150 = scmp.ne.s32.totalorder %s133, %s149
      %p151 = scmp.eq.s32.totalorder %s22, 0
      %p152 = por %p150, %p151
      %p153 = scmp.le.s32.totalorder 1, %s16
      %p154 = scmp.lt.s32.totalorder %s16, 3
      %p155 = pnand %p153, %p154
      %p156 = pneg %p155
      // Predicated region
      $region9: #{tpu_custom_call.1} parent=5 // pred_check
        _
      $region10: #{tpu_custom_call.1} parent=5 // pred_check_branch
        %158 = sbr.rel (%p155) target = $region12
      $region11: #{tpu_custom_call.1} parent=5 // pred_region
        %s159 = ssub.s32 %s16, 1
        // Predicated region
        $region13: #{tpu_custom_call.1} parent=11 // pred_check
          %p160 = pneg %p63
        $region14: #{tpu_custom_call.1} parent=11 // pred_check_branch
          %162 = sbr.rel (%p160) target = $region16
        $region15: #{tpu_custom_call.1} parent=11 // pred_region
          %s163 = smul.u32 2, %s26
          %s165 = ssub.s32 256, 256
          %166 = vsyncadd [#allocation4], %s165
          %s167 = sadd.s32 %s28, %s163
          %s168 = smul.addr %s167, 128
          %s169 = scalar_lea.hbm %s0, %s168
          %s170 = sshll.u32 [#allocation3], 4
          %s171 = int_to_ptr.vmem [resolvable:$true] %s170
          %176 = dma.hbm_to_vmem [thread:$0]  %s169, 256, %s171, [#allocation4], 128, 128, 8
        $region16: #{tpu_custom_call.1} parent=11 // pred_fallthru
          _
      $region12: #{tpu_custom_call.1} parent=5 // pred_fallthru
        _
      %p177 = scmp.lt.s32.totalorder %s16, 2
      // Predicated region
      $region17: #{tpu_custom_call.1} parent=5 // pred_check
        %p178 = pneg %p177
      $region18: #{tpu_custom_call.1} parent=5 // pred_check_branch
        %180 = sbr.rel (%p178) target = $region20
      $region19: #{tpu_custom_call.1} parent=5 // pred_region
        // Predicated region
        $region21: #{tpu_custom_call.1} parent=19 // pred_check
          %p181 = pneg %p85
        $region22: #{tpu_custom_call.1} parent=19 // pred_check_branch
          %183 = sbr.rel (%p181) target = $region24
        $region23: #{tpu_custom_call.1} parent=19 // pred_region
          %s184 = sand.u32 %s16, 1
          %s185 = scalar_lea.sflag [#allocation7], %s184
          %s186 = sand.u32 %s75, 1
          %s187 = smul.addr %s186, 384
          %s188 = scalar_lea.vmem [#allocation6], %s187
          %s189 = smul.u32 16, %s25
          %s190 = smul.u32 3, %s24
          %s192 = ssub.s32 6144, 6144
          %193 = vsyncadd %s185, %s192
          %s194 = smul.addr %s189, 6
          %s195 = sadd.s32 %s190, %s194
          %s196 = smul.addr %s195, 128
          %s197 = scalar_lea.hbm %s1, %s196
          %s198 = sshll.u32 %s188, 4
          %s199 = int_to_ptr.vmem [resolvable:$true] %s198
          %204 = dma.hbm_to_vmem [thread:$0]  %s197, 6144, %s199, %s185, 768, 384, 24
        $region24: #{tpu_custom_call.1} parent=19 // pred_fallthru
          _
        // Predicated region
        $region25: #{tpu_custom_call.1} parent=19 // pred_check
          %p205 = pneg %p111
        $region26: #{tpu_custom_call.1} parent=19 // pred_check_branch
          %207 = sbr.rel (%p205) target = $region28
        $region27: #{tpu_custom_call.1} parent=19 // pred_region
          %s208 = sand.u32 %s16, 1
          %s209 = scalar_lea.sflag [#allocation7], %s208
          %s210 = sand.u32 %s101, 1
          %s211 = smul.addr %s210, 3
          %s212 = scalar_lea.vmem [#allocation8], %s211
          %s213 = smul.u32 3, %s24
          %s215 = ssub.s32 48, 48
          %216 = vsyncadd %s209, %s215
          %s217 = smul.addr %s213, 16
          %s218 = scalar_lea.hbm %s2, %s217
          %s220 = sshll.u32 %s212, 4
          %s221 = int_to_ptr.vmem [resolvable:$true] %s220
          %223 = dma.hbm_to_vmem [thread:$0]  %s218, 48, %s221, %s209
        $region28: #{tpu_custom_call.1} parent=19 // pred_fallthru
          _
      $region20: #{tpu_custom_call.1} parent=5 // pred_fallthru
        _
      %p224 = scmp.le.s32.totalorder 1, %s16
      %p225 = scmp.lt.s32.totalorder %s16, 3
      %p226 = pnand %p224, %p225
      %p227 = pneg %p226
      // Predicated region
      $region29: #{tpu_custom_call.1} parent=5 // pred_check
        _
      $region30: #{tpu_custom_call.1} parent=5 // pred_check_branch
        %229 = sbr.rel (%p226) target = $region32
      $region31: #{tpu_custom_call.1} parent=5 // pred_region
        %s230 = ssub.s32 %s16, 1
        // Predicated region
        $region33: #{tpu_custom_call.1} parent=31 // pred_check
          %p231 = pneg %p63
        $region34: #{tpu_custom_call.1} parent=31 // pred_check_branch
          %233 = sbr.rel (%p231) target = $region36
        $region35: #{tpu_custom_call.1} parent=31 // pred_region
          %234 = dma.done [#allocation4], 256
        $region36: #{tpu_custom_call.1} parent=31 // pred_fallthru
          _
        %s235 = sand.u32 %s21, 1
        %s236 = scalar_lea.sflag [#allocation7], %s235
        %s237 = sand.u32 %s78, 1
        %s238 = smul.addr %s237, 384
        %s239 = scalar_lea.vmem [#allocation6], %s238
        // Predicated region
        $region37: #{tpu_custom_call.1} parent=31 // pred_check
          %p240 = pneg %p91
        $region38: #{tpu_custom_call.1} parent=31 // pred_check_branch
          %242 = sbr.rel (%p240) target = $region40
        $region39: #{tpu_custom_call.1} parent=31 // pred_region
          %243 = dma.done %s236, 6144
        $region40: #{tpu_custom_call.1} parent=31 // pred_fallthru
          _
        %s244 = sand.u32 %s21, 1
        %s245 = scalar_lea.sflag [#allocation7], %s244
        %s246 = sand.u32 %s104, 1
        %s247 = smul.addr %s246, 3
        %s248 = scalar_lea.vmem [#allocation8], %s247
        // Predicated region
        $region41: #{tpu_custom_call.1} parent=31 // pred_check
          %p249 = pneg %p117
        $region42: #{tpu_custom_call.1} parent=31 // pred_check_branch
          %251 = sbr.rel (%p249) target = $region44
        $region43: #{tpu_custom_call.1} parent=31 // pred_region
          %252 = dma.done %s245, 48
        $region44: #{tpu_custom_call.1} parent=31 // pred_fallthru
          _
        %p253 = pneg %p63
        %p254 = pneg %p60
        %s255 = sand.u32 %s21, 1
        %s256 = scalar_lea.sflag [#allocation7], %s255
        %s257 = sand.u32 %s78, 1
        %s258 = smul.addr %s257, 384
        %s259 = scalar_lea.vmem [#allocation6], %s258
        %p260 = pneg %p91
        %p261 = pneg %p88
        %s262 = sand.u32 %s21, 1
        %s263 = scalar_lea.sflag [#allocation7], %s262
        %s264 = sand.u32 %s104, 1
        %s265 = smul.addr %s264, 3
        %s266 = scalar_lea.vmem [#allocation8], %s265
        %p267 = pneg %p117
        %p268 = pneg %p114
        %p269 = pneg %p145
        %p270 = pneg %p142
        %s271 = sand.u32 %s132, 1
        %s272 = scalar_lea.sflag [#allocation5], %s271
        %s273 = sand.u32 %s132, 1
        %s274 = smul.addr %s273, 48
        %s275 = scalar_lea.vmem [#allocation9], %s274
        %s276 = smul.u32 2, %s26
        %s277 = smul.u32 16, %s28
        %s278 = smul.u32 3, %s27
        %s279 = smul.u32 3, %s27
        %s280 = smul.u32 2, %s26
        %s281 = smul.u32 3, %s27
        %p282 = scmp.eq.s32.totalorder %s28, 0
        // Predicated region
        $region45: #{tpu_custom_call.1} parent=31 // pred_check
          %p283 = pneg %p282
        $region46: #{tpu_custom_call.1} parent=31 // pred_check_branch
          %285 = sbr.rel (%p283) target = $region48
        $region47: #{tpu_custom_call.1} parent=31 // pred_region
          %286 = vst [vmem:[#allocation2] sm:$0xff] 0.0
          %287 = vst [vmem:[#allocation2 + $0x8] sm:$0xff] 0.0
          %288 = vst [vmem:[#allocation2 + $0x10] sm:$0xff] 0.0
          %289 = vst [vmem:[#allocation2 + $0x18] sm:$0xff] 0.0
          %290 = vst [vmem:[#allocation2 + $0x20] sm:$0xff] 0.0
          %291 = vst [vmem:[#allocation2 + $0x28] sm:$0xff] 0.0
        $region48: #{tpu_custom_call.1} parent=31 // pred_fallthru
          _
        %v292 = vld [vmem:[#allocation2] sm:$0xff]
        %v293 = vld [vmem:[#allocation2 + $0x8] sm:$0xff]
        %v294 = vld [vmem:[#allocation2 + $0x10] sm:$0xff]
        %v295 = vld [vmem:[#allocation2 + $0x18] sm:$0xff]
        %v296 = vld [vmem:[#allocation2 + $0x20] sm:$0xff]
        %v297 = vld [vmem:[#allocation2 + $0x28] sm:$0xff]
        %v298 = vld [vmem:[#allocation3] sm:$0xff]
        %v299 = vld [vmem:[#allocation3 + $0x8] sm:$0xff]
        %v300 = vld [vmem:[%s239] sm:$0xff]
        %v301 = vld [vmem:[%s239 + $0x8] sm:$0xff]
        %v302 = vld [vmem:[%s239 + $0x10] sm:$0xff]
        %v303 = vld [vmem:[%s239 + $0x18] sm:$0xff]
        %v304 = vld [vmem:[%s239 + $0x20] sm:$0xff]
        %v305 = vld [vmem:[%s239 + $0x28] sm:$0xff]
        %v306 = vld [vmem:[%s239 + $0x30] sm:$0xff]
        %v307 = vld [vmem:[%s239 + $0x38] sm:$0xff]
        %v308 = vld [vmem:[%s239 + $0x40] sm:$0xff]
        %v309 = vld [vmem:[%s239 + $0x48] sm:$0xff]
        %v310 = vld [vmem:[%s239 + $0x50] sm:$0xff]
        %v311 = vld [vmem:[%s239 + $0x58] sm:$0xff]
        %v312 = vld [vmem:[%s239 + $0x60] sm:$0xff]
        %v313 = vld [vmem:[%s239 + $0x68] sm:$0xff]
        %v314 = vld [vmem:[%s239 + $0x70] sm:$0xff]
        %v315 = vld [vmem:[%s239 + $0x78] sm:$0xff]
        %v316 = vld [vmem:[%s239 + $0x80] sm:$0xff]
        %v317 = vld [vmem:[%s239 + $0x88] sm:$0xff]
        %v318 = vld [vmem:[%s239 + $0x90] sm:$0xff]
        %v319 = vld [vmem:[%s239 + $0x98] sm:$0xff]
        %v320 = vld [vmem:[%s239 + $0xa0] sm:$0xff]
        %v321 = vld [vmem:[%s239 + $0xa8] sm:$0xff]
        %v322 = vld [vmem:[%s239 + $0xb0] sm:$0xff]
        %v323 = vld [vmem:[%s239 + $0xb8] sm:$0xff]
        %v324 = vld [vmem:[%s239 + $0xc0] sm:$0xff]
        %v325 = vld [vmem:[%s239 + $0xc8] sm:$0xff]
        %v326 = vld [vmem:[%s239 + $0xd0] sm:$0xff]
        %v327 = vld [vmem:[%s239 + $0xd8] sm:$0xff]
        %v328 = vld [vmem:[%s239 + $0xe0] sm:$0xff]
        %v329 = vld [vmem:[%s239 + $0xe8] sm:$0xff]
        %v330 = vld [vmem:[%s239 + $0xf0] sm:$0xff]
        %v331 = vld [vmem:[%s239 + $0xf8] sm:$0xff]
        %v332 = vld [vmem:[%s239 + $0x100] sm:$0xff]
        %v333 = vld [vmem:[%s239 + $0x108] sm:$0xff]
        %v334 = vld [vmem:[%s239 + $0x110] sm:$0xff]
        %v335 = vld [vmem:[%s239 + $0x118] sm:$0xff]
        %v336 = vld [vmem:[%s239 + $0x120] sm:$0xff]
        %v337 = vld [vmem:[%s239 + $0x128] sm:$0xff]
        %v338 = vld [vmem:[%s239 + $0x130] sm:$0xff]
        %v339 = vld [vmem:[%s239 + $0x138] sm:$0xff]
        %v340 = vld [vmem:[%s239 + $0x140] sm:$0xff]
        %v341 = vld [vmem:[%s239 + $0x148] sm:$0xff]
        %v342 = vld [vmem:[%s239 + $0x150] sm:$0xff]
        %v343 = vld [vmem:[%s239 + $0x158] sm:$0xff]
        %v344 = vld [vmem:[%s239 + $0x160] sm:$0xff]
        %v345 = vld [vmem:[%s239 + $0x168] sm:$0xff]
        %v346 = vld [vmem:[%s239 + $0x170] sm:$0xff]
        %v347 = vld [vmem:[%s239 + $0x178] sm:$0xff]
        %348 = vmatprep.subr.mxu0 %v346
        %349 = vmatpush1.msra.mxu0 %v345
        %350 = vmatprep.subr.mxu0 %v343
        %351 = vmatpush1.msra.mxu0 %v342
        %352 = vmatprep.subr.mxu0 %v340
        %353 = vmatpush1.msra.mxu0 %v339
        %354 = vmatprep.subr.mxu0 %v337
        %355 = vmatpush1.msra.mxu0 %v336
        %356 = vmatprep.subr.mxu0 %v334
        %357 = vmatpush1.msra.mxu0 %v333
        %358 = vmatprep.subr.mxu0 %v331
        %359 = vmatpush1.msra.mxu0 %v330
        %360 = vmatprep.subr.mxu0 %v328
        %361 = vmatpush1.msra.mxu0 %v327
        %362 = vmatprep.subr.mxu0 %v325
        %363 = vmatpush1.msra.mxu0 %v324
        %364 = vmatprep.subr.mxu0 %v322
        %365 = vmatpush1.msra.mxu0 %v321
        %366 = vmatprep.subr.mxu0 %v319
        %367 = vmatpush1.msra.mxu0 %v318
        %368 = vmatprep.subr.mxu0 %v316
        %369 = vmatpush1.msra.mxu0 %v315
        %370 = vmatprep.subr.mxu0 %v313
        %371 = vmatpush1.msra.mxu0 %v312
        %372 = vmatprep.subr.mxu0 %v310
        %373 = vmatpush1.msra.mxu0 %v309
        %374 = vmatprep.subr.mxu0 %v307
        %375 = vmatpush1.msra.mxu0 %v306
        %376 = vmatprep.subr.mxu0 %v304
        %377 = vmatpush1.msra.mxu0 %v303
        %378 = vmatprep.subr.mxu0 %v301
        %379 = vmatpush1.msra.mxu0 %v300
        %380 = vmatprep.subr.mxu0 0.0
        %381 = vmatpush2.msra.mxu0 0.0
        %382 = vmatprep.subr.mxu0 0.0
        %383 = vmatpush2.msra.mxu0 0.0
        %384 = vmatprep.subr.mxu0 0.0
        %385 = vmatpush2.msra.mxu0 0.0
        %386 = vmatprep.subr.mxu0 0.0
        %387 = vmatpush2.msra.mxu0 0.0
        %388 = vmatprep.subr.mxu0 0.0
        %389 = vmatpush2.msra.mxu0 0.0
        %390 = vmatprep.subr.mxu0 0.0
        %391 = vmatpush2.msra.mxu0 0.0
        %392 = vmatprep.subr.mxu0 0.0
        %393 = vmatpush2.msra.mxu0 0.0
        %394 = vmatprep.subr.mxu0 0.0
        %395 = vmatpush2.msra.mxu0 0.0
        %396 = vmatprep.subr.mxu0 0.0
        %397 = vmatpush2.msra.mxu0 0.0
        %398 = vmatprep.subr.mxu0 0.0
        %399 = vmatpush2.msra.mxu0 0.0
        %400 = vmatprep.subr.mxu0 0.0
        %401 = vmatpush2.msra.mxu0 0.0
        %402 = vmatprep.subr.mxu0 0.0
        %403 = vmatpush2.msra.mxu0 0.0
        %404 = vmatprep.subr.mxu0 0.0
        %405 = vmatpush2.msra.mxu0 0.0
        %406 = vmatprep.subr.mxu0 0.0
        %407 = vmatpush2.msra.mxu0 0.0
        %408 = vmatprep.subr.mxu0 0.0
        %409 = vmatpush2.msra.mxu0 0.0
        %410 = vmatprep.subr.mxu0 0.0
        %411 = vmatpush2.msra.mxu0 0.0
        %412 = vmatprep.mubr.f32.mxu0 0.0
        %413 = vmatmul.mubr.f32.gmra.mxu0 %v298
        %v414 = vpop.f32.mrf.mxu0
        %v415 = vadd.f32 0.0, %v414
        %v416 = vpop.f32.mrf.mxu0
        %v417 = vadd.f32 0.0, %v416
        %418 = vmatprep.mubr.f32.mxu0 0.0
        %419 = vmatmul.mubr.f32.gmra.mxu0 %v299
        %v420 = vpop.f32.mrf.mxu0
        %v421 = vadd.f32 0.0, %v420
        %v422 = vpop.f32.mrf.mxu0
        %v423 = vadd.f32 0.0, %v422
        %424 = vdwg.mxu0
        %425 = vmatprep.subr.mxu0 0.0
        %426 = vmatpush1.msra.mxu0 %v347
        %427 = vmatprep.subr.mxu0 0.0
        %428 = vmatpush1.msra.mxu0 %v344
        %429 = vmatprep.subr.mxu0 0.0
        %430 = vmatpush1.msra.mxu0 %v341
        %431 = vmatprep.subr.mxu0 0.0
        %432 = vmatpush1.msra.mxu0 %v338
        %433 = vmatprep.subr.mxu0 0.0
        %434 = vmatpush1.msra.mxu0 %v335
        %435 = vmatprep.subr.mxu0 0.0
        %436 = vmatpush1.msra.mxu0 %v332
        %437 = vmatprep.subr.mxu0 0.0
        %438 = vmatpush1.msra.mxu0 %v329
        %439 = vmatprep.subr.mxu0 0.0
        %440 = vmatpush1.msra.mxu0 %v326
        %441 = vmatprep.subr.mxu0 0.0
        %442 = vmatpush1.msra.mxu0 %v323
        %443 = vmatprep.subr.mxu0 0.0
        %444 = vmatpush1.msra.mxu0 %v320
        %445 = vmatprep.subr.mxu0 0.0
        %446 = vmatpush1.msra.mxu0 %v317
        %447 = vmatprep.subr.mxu0 0.0
        %448 = vmatpush1.msra.mxu0 %v314
        %449 = vmatprep.subr.mxu0 0.0
        %450 = vmatpush1.msra.mxu0 %v311
        %451 = vmatprep.subr.mxu0 0.0
        %452 = vmatpush1.msra.mxu0 %v308
        %453 = vmatprep.subr.mxu0 0.0
        %454 = vmatpush1.msra.mxu0 %v305
        %455 = vmatprep.subr.mxu0 0.0
        %456 = vmatpush1.msra.mxu0 %v302
        %457 = vmatprep.subr.mxu0 0.0
        %458 = vmatpush2.msra.mxu0 0.0
        %459 = vmatprep.subr.mxu0 0.0
        %460 = vmatpush2.msra.mxu0 0.0
        %461 = vmatprep.subr.mxu0 0.0
        %462 = vmatpush2.msra.mxu0 0.0
        %463 = vmatprep.subr.mxu0 0.0
        %464 = vmatpush2.msra.mxu0 0.0
        %465 = vmatprep.subr.mxu0 0.0
        %466 = vmatpush2.msra.mxu0 0.0
        %467 = vmatprep.subr.mxu0 0.0
        %468 = vmatpush2.msra.mxu0 0.0
        %469 = vmatprep.subr.mxu0 0.0
        %470 = vmatpush2.msra.mxu0 0.0
        %471 = vmatprep.subr.mxu0 0.0
        %472 = vmatpush2.msra.mxu0 0.0
        %473 = vmatprep.subr.mxu0 0.0
        %474 = vmatpush2.msra.mxu0 0.0
        %475 = vmatprep.subr.mxu0 0.0
        %476 = vmatpush2.msra.mxu0 0.0
        %477 = vmatprep.subr.mxu0 0.0
        %478 = vmatpush2.msra.mxu0 0.0
        %479 = vmatprep.subr.mxu0 0.0
        %480 = vmatpush2.msra.mxu0 0.0
        %481 = vmatprep.subr.mxu0 0.0
        %482 = vmatpush2.msra.mxu0 0.0
        %483 = vmatprep.subr.mxu0 0.0
        %484 = vmatpush2.msra.mxu0 0.0
        %485 = vmatprep.subr.mxu0 0.0
        %486 = vmatpush2.msra.mxu0 0.0
        %487 = vmatprep.subr.mxu0 0.0
        %488 = vmatpush2.msra.mxu0 0.0
        %489 = vmatprep.mubr.f32.mxu0 0.0
        %490 = vmatmul.mubr.f32.gmra.mxu0 %v298
        %v491 = vpop.f32.mrf.mxu0
        %v492 = vadd.f32 0.0, %v491
        %v493 = vpop.f32.mrf.mxu0
        %494 = vmatprep.mubr.f32.mxu0 0.0
        %495 = vmatmul.mubr.f32.gmra.mxu0 %v299
        %v496 = vpop.f32.mrf.mxu0
        %v497 = vadd.f32 0.0, %v496
        %v498 = vpop.f32.mrf.mxu0
        %499 = vdwg.mxu0
        %v500 = vadd.f32 %v292, %v415
        %v501 = vadd.f32 %v293, %v417
        %v502 = vadd.f32 %v294, %v492
        %v503 = vadd.f32 %v295, %v421
        %v504 = vadd.f32 %v296, %v423
        %v505 = vadd.f32 %v297, %v497
        %506 = vst [vmem:[#allocation2] sm:$0xff] %v500
        %507 = vst [vmem:[#allocation2 + $0x8] sm:$0xff] %v501
        %508 = vst [vmem:[#allocation2 + $0x10] sm:$0xff] %v502
        %509 = vst [vmem:[#allocation2 + $0x18] sm:$0xff] %v503
        %510 = vst [vmem:[#allocation2 + $0x20] sm:$0xff] %v504
        %511 = vst [vmem:[#allocation2 + $0x28] sm:$0xff] %v505
        // Predicated region
        $region49: #{tpu_custom_call.1} parent=31 // pred_check
          %p512 = pneg %p282
        $region50: #{tpu_custom_call.1} parent=31 // pred_check_branch
          %514 = sbr.rel (%p512) target = $region52
        $region51: #{tpu_custom_call.1} parent=31 // pred_region
          %v515 = vld [vmem:[#allocation2] sm:$0xff]
          %v516 = vld [vmem:[#allocation2 + $0x8] sm:$0xff]
          %v517 = vld [vmem:[#allocation2 + $0x10] sm:$0xff]
          %v518 = vld [vmem:[#allocation2 + $0x18] sm:$0xff]
          %v519 = vld [vmem:[#allocation2 + $0x20] sm:$0xff]
          %v520 = vld [vmem:[#allocation2 + $0x28] sm:$0xff]
          %v521 = vld [vmem:[%s248] sm:$0x7]
          %v523 = vlaneseq
          %v524 = vshrl.u32 %v523, 7
          %v525 = vsub.s32 0, %v524
          %v526 = vrot.slane %v521, %v525
          %v527 = vlaneseq
          %v528 = vshrl.u32 %v527, 7
          %v529 = vsub.s32 1, %v528
          %v530 = vrot.slane %v521, %v529
          %v531 = vlaneseq
          %v532 = vshrl.u32 %v531, 7
          %v533 = vsub.s32 2, %v532
          %v534 = vrot.slane %v521, %v533
          %v538 = vadd.f32 %v515, %v526
          %v539 = vadd.f32 %v516, %v530
          %v540 = vadd.f32 %v517, %v534
          %v541 = vadd.f32 %v518, %v526
          %v542 = vadd.f32 %v519, %v530
          %v543 = vadd.f32 %v520, %v534
          %544 = vst [vmem:[%s275] sm:$0xff] %v538
          %545 = vst [vmem:[%s275 + $0x8] sm:$0xff] %v539
          %546 = vst [vmem:[%s275 + $0x10] sm:$0xff] %v540
          %547 = vst [vmem:[%s275 + $0x18] sm:$0xff] %v541
          %548 = vst [vmem:[%s275 + $0x20] sm:$0xff] %v542
          %549 = vst [vmem:[%s275 + $0x28] sm:$0xff] %v543
        $region52: #{tpu_custom_call.1} parent=31 // pred_fallthru
          _
        %s550 = sand.u32 %s132, 1
        %s551 = scalar_lea.sflag [#allocation5], %s550
        %s552 = sand.u32 %s132, 1
        %s553 = smul.addr %s552, 48
        %s554 = scalar_lea.vmem [#allocation9], %s553
        // Predicated region
        $region53: #{tpu_custom_call.1} parent=31 // pred_check
          %p555 = pneg %p142
        $region54: #{tpu_custom_call.1} parent=31 // pred_check_branch
          %557 = sbr.rel (%p555) target = $region56
        $region55: #{tpu_custom_call.1} parent=31 // pred_region
          %s558 = smul.u32 2, %s26
          %s559 = smul.u32 3, %s27
          %s561 = ssub.s32 768, 768
          %562 = vsyncadd %s551, %s561
          %s563 = smul.addr %s558, 6
          %s564 = sadd.s32 %s559, %s563
          %s565 = smul.addr %s564, 128
          %s566 = scalar_lea.hbm %s3, %s565
          %s567 = sshll.u32 %s554, 4
          %s568 = int_to_ptr.vmem [resolvable:$true] %s567
          %573 = dma.vmem_to_hbm [thread:$0]  %s568, 768, %s566, %s551, 384, 768, 24
        $region56: #{tpu_custom_call.1} parent=31 // pred_fallthru
          _
      $region32: #{tpu_custom_call.1} parent=5 // pred_fallthru
        _
      %p574 = scmp.le.s32.totalorder 2, %s16
      // Predicated region
      $region57: #{tpu_custom_call.1} parent=5 // pred_check
        %p575 = pneg %p574
      $region58: #{tpu_custom_call.1} parent=5 // pred_check_branch
        %577 = sbr.rel (%p575) target = $region60
      $region59: #{tpu_custom_call.1} parent=5 // pred_region
        %s578 = ssub.s32 %s16, 2
        // Predicated region
        $region61: #{tpu_custom_call.1} parent=59 // pred_check
          %p579 = pneg %p148
        $region62: #{tpu_custom_call.1} parent=59 // pred_check_branch
          %581 = sbr.rel (%p579) target = $region64
        $region63: #{tpu_custom_call.1} parent=59 // pred_region
          %s582 = sand.u32 %s133, 1
          %s583 = scalar_lea.sflag [#allocation5], %s582
          %s584 = sand.u32 %s133, 1
          %s585 = smul.addr %s584, 48
          %s586 = scalar_lea.vmem [#allocation9], %s585
          %587 = dma.done %s583, 768
        $region64: #{tpu_custom_call.1} parent=59 // pred_fallthru
          _
      $region60: #{tpu_custom_call.1} parent=5 // pred_fallthru
        _
    $region6: #{tpu_custom_call.1} parent=1 // loop_footer
      %s20 = sadd.s32 1, %s16
    $region7: #{tpu_custom_call.1} parent=1 // loop_footer_branch
      %15 = sbr.rel target = $region3
    $region8: #{tpu_custom_call.1} parent=1 // loop_exit
      _
    %588 = vsyncpa [#allocation4], 1
    %s589 = scalar_lea.sflag [#allocation4], 1
    %590 = vsyncpa %s589, 1
    %591 = vsyncpa [#allocation7], 1
    %s592 = scalar_lea.sflag [#allocation7], 1
    %593 = vsyncpa %s592, 1
    %594 = vsyncpa [#allocation5], 1
    %s595 = scalar_lea.sflag [#allocation5], 1
    %596 = vsyncpa %s595, 1

</llo_original>
